<compile_context>
chip_gen: v6e
topology: v6e:2x2x1
jax: 0.10.0
libtpu: 0.0.40
codegen_flags: <defaults>
</compile_context>

<pallas_src>
import jax
import jax.numpy as jnp
import numpy as np
from jax.experimental import pallas as pl
from jax.experimental.pallas import tpu as pltpu


def _round_up(n, m):
    return ((n + m - 1) // m) * m


def _pad_axis(a, axis, size):
    if a.shape[axis] == size:
        return a
    pad = [(0, 0)] * a.ndim
    pad[axis] = (0, size - a.shape[axis])
    return jnp.pad(a, pad)


# --------------------------------------------------------------------------- #
# Kernels
# --------------------------------------------------------------------------- #
def _lstm_cell_kernel(x_ref, h_ref, c_ref, wh_ref, wx_ref, b_ref,
                      h_out_ref, c_out_ref):
    """Single LSTM step with pre-composed ('fused') weights.

    act = h @ W_h_eff + x @ W_x_eff + b_eff  ==  activate(concat(hidden(h), input(x)))
    of the PyTorch module (eval mode).
    """
    act = (jnp.dot(h_ref[...], wh_ref[...], preferred_element_type=jnp.float32)
           + jnp.dot(x_ref[...], wx_ref[...], preferred_element_type=jnp.float32)
           + b_ref[...])
    H = h_ref.shape[-1]
    # NOTE: for H % 128 == 0 these gate slices are lane-aligned; at tiny H the
    # masked selects are negligible VPU work.
    i = act[:, 0 * H:1 * H]
    f = act[:, 1 * H:2 * H]
    g = act[:, 2 * H:3 * H]
    o = act[:, 3 * H:4 * H]
    c_next = (jax.nn.sigmoid(f) * c_ref[...].astype(jnp.float32)
              + jax.nn.sigmoid(i) * jnp.tanh(g))
    h_next = jax.nn.sigmoid(o) * jnp.tanh(c_next)
    c_out_ref[...] = c_next.astype(c_out_ref.dtype)
    h_out_ref[...] = h_next.astype(h_out_ref.dtype)


def _lstm_seq_kernel(x_ref, h0_ref, c0_ref, wh_ref, wx_ref, b_ref,
                     h_out_ref, c_out_ref, h_scr, c_scr):
    """Fused time loop: one grid step per timestep.

    Weights stay VMEM-resident (constant index_map); the recurrent state is
    carried in VMEM scratch across grid iterations.
    """
    t = pl.program_id(0)

    @pl.when(t == 0)
    def _():
        h_scr[...] = h0_ref[...].astype(jnp.float32)
        c_scr[...] = c0_ref[...].astype(jnp.float32)

    H = h_scr.shape[-1]
    act = (jnp.dot(h_scr[...], wh_ref[...], preferred_element_type=jnp.float32)
           + jnp.dot(x_ref[0], wx_ref[...], preferred_element_type=jnp.float32)
           + b_ref[...])
    i = act[:, 0 * H:1 * H]
    f = act[:, 1 * H:2 * H]
    g = act[:, 2 * H:3 * H]
    o = act[:, 3 * H:4 * H]
    c_next = jax.nn.sigmoid(f) * c_scr[...] + jax.nn.sigmoid(i) * jnp.tanh(g)
    h_next = jax.nn.sigmoid(o) * jnp.tanh(c_next)
    c_scr[...] = c_next
    h_scr[...] = h_next
    h_out_ref[0] = h_next.astype(h_out_ref.dtype)
    c_out_ref[0] = c_next.astype(c_out_ref.dtype)


# --------------------------------------------------------------------------- #
# Wrappers
# --------------------------------------------------------------------------- #
def prepare_params(params, weight_dtype=jnp.float32):
    """One-time parameter preparation (hoisted out of the per-step call).

    Pre-composes the two chained Linear layers (exact in eval mode).
    For large H on v6e/v7x, pass weight_dtype=jnp.bfloat16 (f32 accumulation is
    still requested in-kernel).
    """
    h4 = params["hidden_b"].shape[0]               # 4H
    wa_t = params["activate_w"].T                  # (8H, 4H)
    a_h, a_x = wa_t[:h4, :], wa_t[h4:, :]
    w_h = (params["hidden_w"].T @ a_h).astype(weight_dtype)     # (H, 4H)
    w_x = (params["input_w"].T @ a_x).astype(weight_dtype)      # (In, 4H)
    b = (params["activate_b"] + params["hidden_b"] @ a_h
         + params["input_b"] @ a_x).reshape(1, -1).astype(jnp.float32)
    return dict(w_h=w_h, w_x=w_x, b=b)


def lstm_cell_pallas(x, h, c, prepped):
    """x: (B, In), h, c: (B, H).  Returns (h_next, c_next) — module-equivalent."""
    B, H = h.shape
    In = x.shape[-1]
    Bp = _round_up(B, 8)                       # fill f32 sublanes; slice back below
    x_p = _pad_axis(x, 0, Bp)
    h_p = _pad_axis(h, 0, Bp)
    c_p = _pad_axis(c, 0, Bp)

    h4 = 4 * H
    cost = pl.CostEstimate(
        flops=2 * Bp * h4 * (H + In) + 12 * Bp * H,
        transcendentals=5 * Bp * H,
        bytes_accessed=4 * (Bp * (In + 4 * H) + h4 * (H + In + 1)),
    )
    vmem = pl.BlockSpec(memory_space=pltpu.MemorySpace.VMEM)
    h_next, c_next = pl.pallas_call(
        _lstm_cell_kernel,
        out_shape=(jax.ShapeDtypeStruct((Bp, H), h.dtype),
                   jax.ShapeDtypeStruct((Bp, H), c.dtype)),
        in_specs=[vmem] * 6,
        out_specs=(vmem, vmem),
        cost_estimate=cost,
    )(x_p, h_p, c_p, prepped["w_h"], prepped["w_x"], prepped["b"])
    return h_next[:B], c_next[:B]


def lstm_sequence_pallas(xs, h0, c0, prepped):
    """xs: (T, B, In).  Runs T fused LSTM steps in a single pallas_call.

    Returns (hs, cs), each (T, B, H).
    """
    T, B, In = xs.shape
    H = h0.shape[-1]
    Bp = _round_up(B, 8)
    xs_p = _pad_axis(xs, 1, Bp)
    h0_p = _pad_axis(h0, 0, Bp)
    c0_p = _pad_axis(c0, 0, Bp)
    h4 = 4 * H

    cost = pl.CostEstimate(
        flops=T * (2 * Bp * h4 * (H + In) + 12 * Bp * H),
        transcendentals=T * 5 * Bp * H,
        bytes_accessed=4 * (T * Bp * (In + 2 * H) + 2 * Bp * H
                            + h4 * (H + In + 1)),
    )
    grid_spec = pltpu.PrefetchScalarGridSpec(
        num_scalar_prefetch=0,
        grid=(T,),
        in_specs=[
            pl.BlockSpec((1, Bp, In), lambda t: (t, 0, 0)),   # x_t streamed per step
            pl.BlockSpec((Bp, H), lambda t: (0, 0)),          # h0 (read at t==0)
            pl.BlockSpec((Bp, H), lambda t: (0, 0)),          # c0 (read at t==0)
            pl.BlockSpec((H, h4), lambda t: (0, 0)),          # W_h_eff (resident)
            pl.BlockSpec((In, h4), lambda t: (0, 0)),         # W_x_eff (resident)
            pl.BlockSpec((1, h4), lambda t: (0, 0)),          # b_eff   (resident)
        ],
        out_specs=[
            pl.BlockSpec((1, Bp, H), lambda t: (t, 0, 0)),
            pl.BlockSpec((1, Bp, H), lambda t: (t, 0, 0)),
        ],
        scratch_shapes=[pltpu.VMEM((Bp, H), jnp.float32),     # carried h
                        pltpu.VMEM((Bp, H), jnp.float32)],    # carried c
    )
    # NOTE: for large H on v7x (64 MiB VMEM), tile the 4H output axis and set
    # pltpu.CompilerParams(vmem_limit_bytes=...) instead of whole-weight residency.
    hs, cs = pl.pallas_call(
        _lstm_seq_kernel,
        out_shape=(jax.ShapeDtypeStruct((T, Bp, H), h0.dtype),
                   jax.ShapeDtypeStruct((T, Bp, H), c0.dtype)),
        grid_spec=grid_spec,
        compiler_params=pltpu.CompilerParams(
            dimension_semantics=("arbitrary",)),   # recurrent carry => sequential
        cost_estimate=cost,
    )(xs_p, h0_p, c0_p, prepped["w_h"], prepped["w_x"], prepped["b"])
    return hs[:, :B, :], cs[:, :B, :]


# --------------------------------------------------------------------------- #
# Pure-JAX references (unfused, match the PyTorch forward in eval mode)
# --------------------------------------------------------------------------- #
def lstm_cell_ref(x, h, c, params):
    gates = jnp.concatenate(
        [h @ params["hidden_w"].T + params["hidden_b"],
         x @ params["input_w"].T + params["input_b"]], axis=-1)
    act = gates @ params["activate_w"].T + params["activate_b"]
    i, f, g, o = jnp.split(act, 4, axis=-1)
    c_next = jax.nn.sigmoid(f) * c + jax.nn.sigmoid(i) * jnp.tanh(g)
    h_next = jax.nn.sigmoid(o) * jnp.tanh(c_next)
    return h_next, c_next


def lstm_sequence_ref(xs, h0, c0, params):
    def step(carry, x):
        h, c = carry
        h, c = lstm_cell_ref(x, h, c, params)
        return (h, c), (h, c)
    _, (hs, cs) = jax.lax.scan(step, (h0, c0), xs)
    return hs, cs


def init_params(key, hidden_size, input_size):
    """Deterministic init mimicking nn.Linear default (U(-1/sqrt(fan_in), ...))."""
    def linear(k, out_f, in_f):
        kw, kb = jax.random.split(k)
        bound = 1.0 / np.sqrt(in_f)
        w = jax.random.uniform(kw, (out_f, in_f), jnp.float32, -bound, bound)
        b = jax.random.uniform(kb, (out_f,), jnp.float32, -bound, bound)
        return w, b

    k1, k2, k3 = jax.random.split(key, 3)
    hidden_w, hidden_b = linear(k1, 4 * hidden_size, hidden_size)            # self.hidden
    activate_w, activate_b = linear(k2, 4 * hidden_size, 8 * hidden_size)    # self.activate
    input_w, input_b = linear(k3, 4 * hidden_size, input_size)               # self.input
    return dict(hidden_w=hidden_w, hidden_b=hidden_b,
                activate_w=activate_w, activate_b=activate_b,
                input_w=input_w, input_b=input_b)


if __name__ == "__main__":
    # Config.param['LSTM'] stand-in: hidden_size=32, embed_dim=64, is_first=True
    hidden_size = 32
    embed_dim = 64
    batch = 2
    seq_len = 8

    key = jax.random.PRNGKey(0)
    kp, kx, kh, kc, ks = jax.random.split(key, 5)

    params = init_params(kp, hidden_size, embed_dim)
    prepped = prepare_params(params)        # one-time weight pre-composition

    x = jax.random.normal(kx, (batch, embed_dim), jnp.float32)
    h = jax.random.normal(kh, (batch, hidden_size), jnp.float32)
    c = jax.random.normal(kc, (batch, hidden_size), jnp.float32)
    xs = jax.random.normal(ks, (seq_len, batch, embed_dim), jnp.float32)

    # --- single step (module-equivalent forward) ---
    h1, c1 = jax.jit(lstm_cell_pallas)(x, h, c, prepped)
    jax.block_until_ready((h1, c1))
    h1_ref, c1_ref = lstm_cell_ref(x, h, c, params)
    np.testing.assert_allclose(np.asarray(h1), np.asarray(h1_ref), rtol=1e-3, atol=1e-3)
    np.testing.assert_allclose(np.asarray(c1), np.asarray(c1_ref), rtol=1e-3, atol=1e-3)

    # --- fused sequence (grid over T, weights VMEM-resident, state in scratch) ---
    hs, cs = jax.jit(lstm_sequence_pallas)(xs, h, c, prepped)
    jax.block_until_ready((hs, cs))
    hs_ref, cs_ref = lstm_sequence_ref(xs, h, c, params)
    np.testing.assert_allclose(np.asarray(hs), np.asarray(hs_ref), rtol=1e-3, atol=2e-3)
    np.testing.assert_allclose(np.asarray(cs), np.asarray(cs_ref), rtol=1e-3, atol=2e-3)

    print("KERNEL_OK")
</pallas_src>

<mosaic_0001>
module attributes {stable_mosaic.version = 11 : i64} {
  func.func @_lstm_cell_kernel(%arg0: memref<8x64xf32, #tpu.memory_space<vmem>>, %arg1: memref<8x32xf32, #tpu.memory_space<vmem>>, %arg2: memref<8x32xf32, #tpu.memory_space<vmem>>, %arg3: memref<32x128xf32, #tpu.memory_space<vmem>>, %arg4: memref<64x128xf32, #tpu.memory_space<vmem>>, %arg5: memref<1x128xf32, #tpu.memory_space<vmem>>, %arg6: memref<8x32xf32, #tpu.memory_space<vmem>>, %arg7: memref<8x32xf32, #tpu.memory_space<vmem>>) attributes {dimension_semantics = [], scalar_prefetch = 0 : i64, scratch_operands = 0 : i64, tpu.core_type = #tpu.core_type<tc>} {
    %c0 = arith.constant 0 : index
    %c0_0 = arith.constant 0 : index
    %0 = vector.load %arg1[%c0, %c0_0] : memref<8x32xf32, #tpu.memory_space<vmem>>, vector<8x32xf32>
    %c0_1 = arith.constant 0 : index
    %c0_2 = arith.constant 0 : index
    %1 = vector.load %arg3[%c0_1, %c0_2] : memref<32x128xf32, #tpu.memory_space<vmem>>, vector<32x128xf32>
    %cst = arith.constant dense<0.000000e+00> : vector<8x128xf32>
    %2 = tpu.matmul %0, %1, %cst {dimension_numbers = #tpu.dot_dimension_numbers<[1], [0], [0], [1], [0, 0, 1, 1], [], []>} : vector<8x32xf32>, vector<32x128xf32>, vector<8x128xf32> -> vector<8x128xf32>
    %c0_3 = arith.constant 0 : index
    %c0_4 = arith.constant 0 : index
    %3 = vector.load %arg0[%c0_3, %c0_4] : memref<8x64xf32, #tpu.memory_space<vmem>>, vector<8x64xf32>
    %c0_5 = arith.constant 0 : index
    %c0_6 = arith.constant 0 : index
    %4 = vector.load %arg4[%c0_5, %c0_6] : memref<64x128xf32, #tpu.memory_space<vmem>>, vector<64x128xf32>
    %cst_7 = arith.constant dense<0.000000e+00> : vector<8x128xf32>
    %5 = tpu.matmul %3, %4, %cst_7 {dimension_numbers = #tpu.dot_dimension_numbers<[1], [0], [0], [1], [0, 0, 1, 1], [], []>} : vector<8x64xf32>, vector<64x128xf32>, vector<8x128xf32> -> vector<8x128xf32>
    %6 = arith.addf %2, %5 : vector<8x128xf32>
    %c0_8 = arith.constant 0 : index
    %c0_9 = arith.constant 0 : index
    %7 = vector.load %arg5[%c0_8, %c0_9] : memref<1x128xf32, #tpu.memory_space<vmem>>, vector<1x128xf32>
    %8 = vector.broadcast %7 : vector<1x128xf32> to vector<8x128xf32>
    %9 = arith.addf %6, %8 : vector<8x128xf32>
    %10 = vector.extract_strided_slice %9 {offsets = [0, 0], sizes = [8, 32], strides = [1, 1]} : vector<8x128xf32> to vector<8x32xf32>
    %11 = vector.extract_strided_slice %9 {offsets = [0, 32], sizes = [8, 32], strides = [1, 1]} : vector<8x128xf32> to vector<8x32xf32>
    %12 = vector.extract_strided_slice %9 {offsets = [0, 64], sizes = [8, 32], strides = [1, 1]} : vector<8x128xf32> to vector<8x32xf32>
    %13 = vector.extract_strided_slice %9 {offsets = [0, 96], sizes = [8, 32], strides = [1, 1]} : vector<8x128xf32> to vector<8x32xf32>
    %14 = arith.negf %11 : vector<8x32xf32>
    %15 = math.exp %14 : vector<8x32xf32>
    %cst_10 = arith.constant 1.000000e+00 : f32
    %16 = vector.broadcast %cst_10 : f32 to vector<8x32xf32>
    %17 = arith.addf %16, %15 : vector<8x32xf32>
    %18 = arith.divf %16, %17 : vector<8x32xf32>
    %c0_11 = arith.constant 0 : index
    %c0_12 = arith.constant 0 : index
    %19 = vector.load %arg2[%c0_11, %c0_12] : memref<8x32xf32, #tpu.memory_space<vmem>>, vector<8x32xf32>
    %20 = arith.mulf %18, %19 : vector<8x32xf32>
    %21 = arith.negf %10 : vector<8x32xf32>
    %22 = math.exp %21 : vector<8x32xf32>
    %cst_13 = arith.constant 1.000000e+00 : f32
    %23 = vector.broadcast %cst_13 : f32 to vector<8x32xf32>
    %24 = arith.addf %23, %22 : vector<8x32xf32>
    %25 = arith.divf %23, %24 : vector<8x32xf32>
    %26 = math.tanh %12 : vector<8x32xf32>
    %27 = arith.mulf %25, %26 : vector<8x32xf32>
    %28 = arith.addf %20, %27 : vector<8x32xf32>
    %29 = arith.negf %13 : vector<8x32xf32>
    %30 = math.exp %29 : vector<8x32xf32>
    %cst_14 = arith.constant 1.000000e+00 : f32
    %31 = vector.broadcast %cst_14 : f32 to vector<8x32xf32>
    %32 = arith.addf %31, %30 : vector<8x32xf32>
    %33 = arith.divf %31, %32 : vector<8x32xf32>
    %34 = math.tanh %28 : vector<8x32xf32>
    %35 = arith.mulf %33, %34 : vector<8x32xf32>
    %c0_15 = arith.constant 0 : index
    %c0_16 = arith.constant 0 : index
    %36 = vector.load %arg7[%c0_15, %c0_16] : memref<8x32xf32, #tpu.memory_space<vmem>>, vector<8x32xf32>
    tpu.vector_store %arg7[%c0_15, %c0_16], %28 {strides = array<i32>} : memref<8x32xf32, #tpu.memory_space<vmem>>, vector<8x32xf32>,
    %c0_17 = arith.constant 0 : index
    %c0_18 = arith.constant 0 : index
    %37 = vector.load %arg6[%c0_17, %c0_18] : memref<8x32xf32, #tpu.memory_space<vmem>>, vector<8x32xf32>
    tpu.vector_store %arg6[%c0_17, %c0_18], %35 {strides = array<i32>} : memref<8x32xf32, #tpu.memory_space<vmem>>, vector<8x32xf32>,
    return
  }
}

</mosaic_0001>

<llo_original>
// kernel: lstm_cell_pallas.1
$region0: #{lstm_cell_pallas.1}
  #allocation0 [shape = 'u32[]', space=smem, size = 0x4, offset = 0x4, fixed_abs, tag = 'smem constant byte address 0x4 - core index']
  #allocation1 [shape = 'u32[144,128]{1,0:T(1,128)}', space=vmem, size = 0x12000, scoped, tag = 'internal scratch']
  %s0 = inlined_call_operand.vmem [shape: f32[8,64], index: 0, kind: input, shape index: {}]
  %s1 = inlined_call_operand.vmem [shape: f32[8,32], index: 1, kind: input, shape index: {}]
  %s2 = inlined_call_operand.vmem [shape: f32[8,32], index: 2, kind: input, shape index: {}]
  %s3 = inlined_call_operand.vmem [shape: f32[32,128], index: 3, kind: input, shape index: {}]
  %s4 = inlined_call_operand.hbm [shape: f32[64,128], index: 4, kind: input, shape index: {}]
  %s5 = inlined_call_operand.vmem [shape: f32[1,128], index: 5, kind: input, shape index: {}]
  %s6 = inlined_call_operand.vmem [shape: f32[8,32], index: 6, kind: output, shape index: {0}]
  %s7 = inlined_call_operand.vmem [shape: f32[8,32], index: 7, kind: output, shape index: {1}]
  %8 = xla_tuple %s6, %s7
  %s9 = sld [smem:[#allocation0]]
  $region46: #{lstm_cell_pallas.1} parent=0
    _
  %s11 = ssub.s32 1, %s9
  %s12 = scalar_select 0, %s11, %s9
  $region1: #{lstm_cell_pallas.1} parent=0
    #allocation2 [shape = 'u8[32768]{0}', space=vmem, size = 0x8000, scoped, tag = 'input window, operand 4, single buffered']
    #allocation3 [shape = 's32[1]{0}', space=sflag, size = 0x4, scoped, tag = 'scoped memory for lstm_cell_pallas.1']
    %13 = vsyncpa [#allocation3], 0
    // Predicated region
    $region2: #{lstm_cell_pallas.1} parent=1 // pred_check
      _
    $region3: #{lstm_cell_pallas.1} parent=1 // pred_check_branch
      %15 = sbr.rel (0) target = $region5
    $region4: #{lstm_cell_pallas.1} parent=1 // pred_region
      _
    $region5: #{lstm_cell_pallas.1} parent=1 // pred_fallthru
      _
    // Predicated region
    $region6: #{lstm_cell_pallas.1} parent=1 // pred_check
      _
    $region7: #{lstm_cell_pallas.1} parent=1 // pred_check_branch
      %17 = sbr.rel (0) target = $region9
    $region8: #{lstm_cell_pallas.1} parent=1 // pred_region
      _
    $region9: #{lstm_cell_pallas.1} parent=1 // pred_fallthru
      _
    // Predicated region
    $region10: #{lstm_cell_pallas.1} parent=1 // pred_check
      _
    $region11: #{lstm_cell_pallas.1} parent=1 // pred_check_branch
      %19 = sbr.rel (0) target = $region13
    $region12: #{lstm_cell_pallas.1} parent=1 // pred_region
      _
    $region13: #{lstm_cell_pallas.1} parent=1 // pred_fallthru
      _
    // Predicated region
    $region14: #{lstm_cell_pallas.1} parent=1 // pred_check
      _
    $region15: #{lstm_cell_pallas.1} parent=1 // pred_check_branch
      %21 = sbr.rel (0) target = $region17
    $region16: #{lstm_cell_pallas.1} parent=1 // pred_region
      _
    $region17: #{lstm_cell_pallas.1} parent=1 // pred_fallthru
      _
    // Predicated region
    $region18: #{lstm_cell_pallas.1} parent=1 // pred_check
      _
    $region19: #{lstm_cell_pallas.1} parent=1 // pred_check_branch
      %23 = sbr.rel (0) target = $region21
    $region20: #{lstm_cell_pallas.1} parent=1 // pred_region
      %s25 = ssub.s32 1024, 1024
      %26 = vsyncadd [#allocation3], %s25
      %s27 = sshll.u32 [#allocation2], 4
      %s28 = int_to_ptr.vmem [resolvable:$true] %s27
      %33 = dma.hbm_to_vmem [thread:$0]  %s4, 1024, %s28, [#allocation3], 128, 128, 8
    $region21: #{lstm_cell_pallas.1} parent=1 // pred_fallthru
      _
    // Predicated region
    $region22: #{lstm_cell_pallas.1} parent=1 // pred_check
      _
    $region23: #{lstm_cell_pallas.1} parent=1 // pred_check_branch
      %35 = sbr.rel (0) target = $region25
    $region24: #{lstm_cell_pallas.1} parent=1 // pred_region
      _
    $region25: #{lstm_cell_pallas.1} parent=1 // pred_fallthru
      _
    // Predicated region
    $region26: #{lstm_cell_pallas.1} parent=1 // pred_check
      _
    $region27: #{lstm_cell_pallas.1} parent=1 // pred_check_branch
      %37 = sbr.rel (0) target = $region29
    $region28: #{lstm_cell_pallas.1} parent=1 // pred_region
      %38 = dma.done [#allocation3], 1024
    $region29: #{lstm_cell_pallas.1} parent=1 // pred_fallthru
      _
    %v39 = vld [vmem:[%s1] sm:$0xff]
    %v40 = vld [vmem:[%s3] sm:$0xff]
    %v41 = vld [vmem:[%s3 + $0x8] sm:$0xff]
    %v42 = vld [vmem:[%s3 + $0x10] sm:$0xff]
    %v43 = vld [vmem:[%s3 + $0x18] sm:$0xff]
    %v44 = vld [vmem:[%s0] sm:$0xff]
    %v45 = vld [vmem:[#allocation2] sm:$0xff]
    %v46 = vld [vmem:[#allocation2 + $0x8] sm:$0xff]
    %v47 = vld [vmem:[#allocation2 + $0x10] sm:$0xff]
    %v48 = vld [vmem:[#allocation2 + $0x18] sm:$0xff]
    %v49 = vld [vmem:[#allocation2 + $0x20] sm:$0xff]
    %v50 = vld [vmem:[#allocation2 + $0x28] sm:$0xff]
    %v51 = vld [vmem:[#allocation2 + $0x30] sm:$0xff]
    %v52 = vld [vmem:[#allocation2 + $0x38] sm:$0xff]
    %vm53 = vcmask 523264
    %v55 = vsel %vm53, %v44, 0
    %57 = vmatprep.subr.mxu0 0.0
    %58 = vmatpush1.msra.mxu0 0.0
    %59 = vmatprep.subr.mxu0 0.0
    %60 = vmatpush1.msra.mxu0 0.0
    %61 = vmatprep.subr.mxu0 0.0
    %62 = vmatpush1.msra.mxu0 0.0
    %63 = vmatprep.subr.mxu0 0.0
    %64 = vmatpush1.msra.mxu0 0.0
    %65 = vmatprep.subr.mxu0 0.0
    %66 = vmatpush1.msra.mxu0 0.0
    %67 = vmatprep.subr.mxu0 0.0
    %68 = vmatpush1.msra.mxu0 0.0
    %69 = vmatprep.subr.mxu0 0.0
    %70 = vmatpush1.msra.mxu0 0.0
    %71 = vmatprep.subr.mxu0 0.0
    %72 = vmatpush1.msra.mxu0 0.0
    %73 = vmatprep.subr.mxu0 0.0
    %74 = vmatpush1.msra.mxu0 %v52
    %75 = vmatprep.subr.mxu0 0.0
    %76 = vmatpush1.msra.mxu0 %v51
    %77 = vmatprep.subr.mxu0 0.0
    %78 = vmatpush1.msra.mxu0 %v50
    %79 = vmatprep.subr.mxu0 0.0
    %80 = vmatpush1.msra.mxu0 %v49
    %81 = vmatprep.subr.mxu0 0.0
    %82 = vmatpush1.msra.mxu0 %v48
    %83 = vmatprep.subr.mxu0 0.0
    %84 = vmatpush1.msra.mxu0 %v47
    %85 = vmatprep.subr.mxu0 0.0
    %86 = vmatpush1.msra.mxu0 %v46
    %87 = vmatprep.subr.mxu0 0.0
    %88 = vmatpush1.msra.mxu0 %v45
    %89 = vmatprep.subr.mxu0 0.0
    %90 = vmatpush2.msra.mxu0 0.0
    %91 = vmatprep.subr.mxu0 0.0
    %92 = vmatpush2.msra.mxu0 0.0
    %93 = vmatprep.subr.mxu0 0.0
    %94 = vmatpush2.msra.mxu0 0.0
    %95 = vmatprep.subr.mxu0 0.0
    %96 = vmatpush2.msra.mxu0 0.0
    %97 = vmatprep.subr.mxu0 0.0
    %98 = vmatpush2.msra.mxu0 0.0
    %99 = vmatprep.subr.mxu0 0.0
    %100 = vmatpush2.msra.mxu0 0.0
    %101 = vmatprep.subr.mxu0 0.0
    %102 = vmatpush2.msra.mxu0 0.0
    %103 = vmatprep.subr.mxu0 0.0
    %104 = vmatpush2.msra.mxu0 0.0
    %105 = vmatprep.subr.mxu0 0.0
    %106 = vmatpush2.msra.mxu0 0.0
    %107 = vmatprep.subr.mxu0 0.0
    %108 = vmatpush2.msra.mxu0 0.0
    %109 = vmatprep.subr.mxu0 0.0
    %110 = vmatpush2.msra.mxu0 0.0
    %111 = vmatprep.subr.mxu0 0.0
    %112 = vmatpush2.msra.mxu0 0.0
    %113 = vmatprep.subr.mxu0 0.0
    %114 = vmatpush2.msra.mxu0 0.0
    %115 = vmatprep.subr.mxu0 0.0
    %116 = vmatpush2.msra.mxu0 0.0
    %117 = vmatprep.subr.mxu0 0.0
    %118 = vmatpush2.msra.mxu0 0.0
    %119 = vmatprep.subr.mxu0 0.0
    %120 = vmatpush2.msra.mxu0 0.0
    %121 = vmatprep.mubr.f32.mxu0 0.0
    %122 = vmatmul.mubr.f32.gmra.mxu0 %v55
    %v123 = vpop.f32.mrf.mxu0
    %v124 = vadd.f32 0.0, %v123
    %v125 = vpop.f32.mrf.mxu0
    %126 = vdwg.mxu0
    %vm127 = vcmask 261120
    %v129 = vsel %vm127, %v39, 0
    %131 = vmatprep.subr.mxu0 0.0
    %132 = vmatpush1.msra.mxu0 0.0
    %133 = vmatprep.subr.mxu0 0.0
    %134 = vmatpush1.msra.mxu0 0.0
    %135 = vmatprep.subr.mxu0 0.0
    %136 = vmatpush1.msra.mxu0 0.0
    %137 = vmatprep.subr.mxu0 0.0
    %138 = vmatpush1.msra.mxu0 0.0
    %139 = vmatprep.subr.mxu0 0.0
    %140 = vmatpush1.msra.mxu0 0.0
    %141 = vmatprep.subr.mxu0 0.0
    %142 = vmatpush1.msra.mxu0 0.0
    %143 = vmatprep.subr.mxu0 0.0
    %144 = vmatpush1.msra.mxu0 0.0
    %145 = vmatprep.subr.mxu0 0.0
    %146 = vmatpush1.msra.mxu0 0.0
    %147 = vmatprep.subr.mxu0 0.0
    %148 = vmatpush1.msra.mxu0 0.0
    %149 = vmatprep.subr.mxu0 0.0
    %150 = vmatpush1.msra.mxu0 0.0
    %151 = vmatprep.subr.mxu0 0.0
    %152 = vmatpush1.msra.mxu0 0.0
    %153 = vmatprep.subr.mxu0 0.0
    %154 = vmatpush1.msra.mxu0 0.0
    %155 = vmatprep.subr.mxu0 0.0
    %156 = vmatpush1.msra.mxu0 %v43
    %157 = vmatprep.subr.mxu0 0.0
    %158 = vmatpush1.msra.mxu0 %v42
    %159 = vmatprep.subr.mxu0 0.0
    %160 = vmatpush1.msra.mxu0 %v41
    %161 = vmatprep.subr.mxu0 0.0
    %162 = vmatpush1.msra.mxu0 %v40
    %163 = vmatprep.subr.mxu0 0.0
    %164 = vmatpush2.msra.mxu0 0.0
    %165 = vmatprep.subr.mxu0 0.0
    %166 = vmatpush2.msra.mxu0 0.0
    %167 = vmatprep.subr.mxu0 0.0
    %168 = vmatpush2.msra.mxu0 0.0
    %169 = vmatprep.subr.mxu0 0.0
    %170 = vmatpush2.msra.mxu0 0.0
    %171 = vmatprep.subr.mxu0 0.0
    %172 = vmatpush2.msra.mxu0 0.0
    %173 = vmatprep.subr.mxu0 0.0
    %174 = vmatpush2.msra.mxu0 0.0
    %175 = vmatprep.subr.mxu0 0.0
    %176 = vmatpush2.msra.mxu0 0.0
    %177 = vmatprep.subr.mxu0 0.0
    %178 = vmatpush2.msra.mxu0 0.0
    %179 = vmatprep.subr.mxu0 0.0
    %180 = vmatpush2.msra.mxu0 0.0
    %181 = vmatprep.subr.mxu0 0.0
    %182 = vmatpush2.msra.mxu0 0.0
    %183 = vmatprep.subr.mxu0 0.0
    %184 = vmatpush2.msra.mxu0 0.0
    %185 = vmatprep.subr.mxu0 0.0
    %186 = vmatpush2.msra.mxu0 0.0
    %187 = vmatprep.subr.mxu0 0.0
    %188 = vmatpush2.msra.mxu0 0.0
    %189 = vmatprep.subr.mxu0 0.0
    %190 = vmatpush2.msra.mxu0 0.0
    %191 = vmatprep.subr.mxu0 0.0
    %192 = vmatpush2.msra.mxu0 0.0
    %193 = vmatprep.subr.mxu0 0.0
    %194 = vmatpush2.msra.mxu0 0.0
    %195 = vmatprep.mubr.f32.mxu0 0.0
    %196 = vmatmul.mubr.f32.gmra.mxu0 %v129
    %v197 = vpop.f32.mrf.mxu0
    %v198 = vadd.f32 %v124, %v197
    %v199 = vpop.f32.mrf.mxu0
    %200 = vdwg.mxu0
    %v201 = vld [vmem:[%s5] sm:$0x1]
    %v203 = vlaneseq
    %v204 = vshrl.u32 %v203, 7
    %v205 = vsub.s32 0, %v204
    %v206 = vrot.slane %v201, %v205
    %v208 = vadd.f32 %v198, %v206
    %v209 = vxor.u32 %v208, 2147483648
    %v210 = vmul.f32 %v209, 1.442695
    %v211 = vpow.pop %v210
    %v212 = vadd.f32 %v211, 1.0
    %v213 = vrcp.pop %v212
    %v214 = vmul.f32 1.0, %v213
    %v215 = vld [vmem:[%s2] sm:$0xff]
    %217 = vrot.lane.b32.xlu0 %v215, 32
    %v218 = vpop.permute.xlu0 %217
    %v220 = vmul.f32 %v214, %v218
    %v221 = vtanh.pop %v208
    %223 = vrot.lane.b32.xlu0 %v221, 64
    %v224 = vpop.permute.xlu0 %223
    %v226 = vmul.f32 %v214, %v224
    %228 = vrot.lane.b32.xlu0 %v226, 32
    %v229 = vpop.permute.xlu0 %228
    %v231 = vadd.f32 %v220, %v229
    %v232 = vtanh.pop %v231
    %234 = vrot.lane.b32.xlu0 %v232, 64
    %v235 = vpop.permute.xlu0 %234
    %v237 = vmul.f32 %v214, %v235
    %239 = vrot.lane.b32.xlu0 %v231, 96
    %v240 = vpop.permute.xlu0 %239
    %242 = vst.msk [vmem:[%s7] sm:$0xff] %vm127, %v240
    %244 = vrot.lane.b32.xlu0 %v237, 32
    %v245 = vpop.permute.xlu0 %244
    %247 = vst.msk [vmem:[%s6] sm:$0xff] %vm127, %v245
    // Predicated region
    $region30: #{lstm_cell_pallas.1} parent=1 // pred_check
      _
    $region31: #{lstm_cell_pallas.1} parent=1 // pred_check_branch
      %249 = sbr.rel (0) target = $region33
    $region32: #{lstm_cell_pallas.1} parent=1 // pred_region
      _
    $region33: #{lstm_cell_pallas.1} parent=1 // pred_fallthru
      _
    // Predicated region
    $region34: #{lstm_cell_pallas.1} parent=1 // pred_check
      _
    $region35: #{lstm_cell_pallas.1} parent=1 // pred_check_branch
      %251 = sbr.rel (0) target = $region37
    $region36: #{lstm_cell_pallas.1} parent=1 // pred_region
      _
    $region37: #{lstm_cell_pallas.1} parent=1 // pred_fallthru
      _
    // Predicated region
    $region38: #{lstm_cell_pallas.1} parent=1 // pred_check
      _
    $region39: #{lstm_cell_pallas.1} parent=1 // pred_check_branch
      %253 = sbr.rel (0) target = $region41
    $region40: #{lstm_cell_pallas.1} parent=1 // pred_region
      _
    $region41: #{lstm_cell_pallas.1} parent=1 // pred_fallthru
      _
    // Predicated region
    $region42: #{lstm_cell_pallas.1} parent=1 // pred_check
      _
    $region43: #{lstm_cell_pallas.1} parent=1 // pred_check_branch
      %255 = sbr.rel (0) target = $region45
    $region44: #{lstm_cell_pallas.1} parent=1 // pred_region
      _
    $region45: #{lstm_cell_pallas.1} parent=1 // pred_fallthru
      _
    %256 = vsyncpa [#allocation3], 1

</llo_original>
